<compile_context>
chip_gen: v7x
topology: tpu7x:2x2x1
jax: 0.10.0
libtpu: 0.0.40
codegen_flags: <defaults>
</compile_context>

<pallas_src>
import functools

import jax
import jax.numpy as jnp
from jax.experimental import pallas as pl
from jax.experimental.pallas import tpu as pltpu


def _ce_kernel(pad_id, tgt_ref, logits_ref, out_ref):
    """One (TM, V) logits block -> packed per-tile partial (sum, count)."""
    x = logits_ref[...]                                      # (TM, V) input dtype
    tgt = tgt_ref[...]                                       # (TM, 1) int32

    # Row max in the INPUT dtype (bf16 VPU on v6e/v7x packs 2 elems/lane).
    row_max = jnp.max(x, axis=-1, keepdims=True)             # (TM, 1)

    # Target-logit gather directly from the RAW logits so the shifted tensor
    # is never reused / materialized for a second pass.
    col = jax.lax.broadcasted_iota(jnp.int32, x.shape, 1)
    onehot = col == tgt
    tgt_logit = jnp.sum(jnp.where(onehot, x, jnp.zeros_like(x)),
                        axis=-1, keepdims=True).astype(jnp.float32)   # (TM, 1)

    # Stable log-sum-exp; only the exp argument / accumulation is f32.
    # (exp kept in f32: accept the EUP-bound ceiling on v7x for numerics.)
    shifted = (x - row_max).astype(jnp.float32)               # (TM, V) f32
    sum_exp = jnp.sum(jnp.exp(shifted), axis=-1, keepdims=True)        # (TM, 1)

    nll = row_max.astype(jnp.float32) + jnp.log(sum_exp) - tgt_logit   # (TM, 1)

    # ignore_index masking; select (not mul-by-0) so NaN/Inf from garbage
    # rows of a partial last block cannot propagate into the partial sum.
    valid = tgt != pad_id                                      # (TM, 1) bool
    part_sum = jnp.sum(jnp.where(valid, nll, 0.0))             # scalar f32
    part_cnt = jnp.sum(valid.astype(jnp.float32))              # scalar f32

    # Single packed per-tile output block: sublane 0 = sum, sublane 1 = count.
    sub = jax.lax.broadcasted_iota(jnp.int32, out_ref.shape, 1)
    out_ref[...] = jnp.where(sub == 0, part_sum,
                             jnp.where(sub == 1, part_cnt, 0.0))


def _vmem_capacity_bytes():
    try:
        info = pltpu.get_tpu_info()
        cap = getattr(info, "vmem_capacity_bytes", None)
        if cap:
            return int(cap)
    except Exception:
        pass
    return 64 << 20        # conservative fallback (v7x per-TC VMEM)


def _choose_tile_rows(n_rows, vocab, itemsize, block_bytes):
    # As many rows as fit in ~block_bytes; no artificial row cap (rows map to
    # sublanes, so thousands of rows are fine and amortize per-step overhead).
    tm = block_bytes // max(1, vocab * itemsize)
    tm = max(8, (int(tm) // 8) * 8)                            # multiple of 8
    if n_rows > 8:
        # keep >= 2 grid steps (megacore on v7x) and block <= row count
        tm = min(tm, max(8, ((n_rows - 1) // 8) * 8))
    return int(tm)


def sequence_cross_entropy_loss(predictions, targets, pad_id=0,
                                tile_rows=None, block_bytes=None):
    """predictions: (B, S, V) float logits; targets: (B, S) int.
    Returns scalar mean CE over non-pad tokens (NaN if all tokens are pad)."""
    B, S, V = predictions.shape
    N = B * S
    logits = predictions.reshape(N, V)            # keep HBM dtype (bf16 ok)
    tgt = targets.reshape(N).astype(jnp.int32)

    itemsize = jnp.dtype(predictions.dtype).itemsize

    # Generation-aware sizing: 128 MiB VMEM (v5e/v6e) -> bigger blocks and a
    # higher limit; 64 MiB (v7x) -> smaller blocks, <= ~46 MiB request.
    vmem_cap = _vmem_capacity_bytes()
    big_vmem = vmem_cap >= (100 << 20)
    if block_bytes is None:
        block_bytes = (6 << 20) if big_vmem else (3 << 20)

    if tile_rows is None:
        tm = _choose_tile_rows(N, V, itemsize, block_bytes)
    else:
        tm = max(8, (int(tile_rows) // 8) * 8)
        if N > 8:
            tm = min(tm, max(8, ((N - 1) // 8) * 8))

    n_tiles = (N + tm - 1) // tm

    # Pad only the (tiny) targets vector so garbage rows of the partial last
    # logits block carry pad_id and get masked in-kernel; the big logits
    # array is never copied or padded.
    pad_rows = n_tiles * tm - N
    if pad_rows:
        tgt = jnp.concatenate([tgt, jnp.full((pad_rows,), pad_id, jnp.int32)])
    tgt2d = tgt.reshape(n_tiles * tm, 1)

    # VMEM budget: double-buffered input block + ~4 f32-block-equivalents of
    # in-kernel temporaries, capped well below physical capacity.
    in_blk = tm * V * itemsize
    f32_blk = tm * V * 4
    cap = (96 << 20) if big_vmem else (46 << 20)
    vmem_limit = int(min(cap, max(32 << 20, 2 * in_blk + 4 * f32_blk + (2 << 20))))

    kernel = functools.partial(_ce_kernel, pad_id)

    partials = pl.pallas_call(
        kernel,
        out_shape=jax.ShapeDtypeStruct((n_tiles, 8, 128), jnp.float32),
        grid_spec=pltpu.PrefetchScalarGridSpec(
            num_scalar_prefetch=0,
            grid=(n_tiles,),
            in_specs=[
                pl.BlockSpec((tm, 1), lambda i: (i, 0)),
                pl.BlockSpec((tm, V), lambda i: (i, 0)),
            ],
            out_specs=pl.BlockSpec((1, 8, 128), lambda i: (i, 0, 0)),
        ),
        compiler_params=pltpu.CompilerParams(
            dimension_semantics=("parallel",),
            vmem_limit_bytes=vmem_limit,
        ),
        cost_estimate=pl.CostEstimate(
            flops=5 * N * V,
            transcendentals=N * V,
            bytes_accessed=N * V * itemsize + N * 4,
        ),
    )(tgt2d, logits)

    loss_sum = jnp.sum(partials[:, 0, 0])
    # per-tile counts are exact small integers; sum as int32 for exactness
    count = jnp.sum(partials[:, 1, 0].astype(jnp.int32)).astype(jnp.float32)
    return (loss_sum / count).astype(jnp.float32)


def _reference_loss(predictions, targets, pad_id=0):
    B, S, V = predictions.shape
    logits = predictions.reshape(-1, V).astype(jnp.float32)
    tgt = targets.reshape(-1)
    logp = jax.nn.log_softmax(logits, axis=-1)
    nll = -jnp.take_along_axis(logp, tgt[:, None], axis=-1)[:, 0]
    valid = (tgt != pad_id).astype(jnp.float32)
    return jnp.sum(nll * valid) / jnp.sum(valid)


if __name__ == "__main__":
    key = jax.random.PRNGKey(0)
    B, S, V = 2, 9, 128
    pad_id = 0

    k1, k2 = jax.random.split(key)
    predictions = jax.random.normal(k1, (B, S, V), dtype=jnp.float32)
    targets = jax.random.randint(k2, (B, S), 0, V, dtype=jnp.int32)
    # sprinkle some pad tokens so ignore_index actually matters
    targets = targets.at[:, -2:].set(pad_id)

    ref = _reference_loss(predictions, targets, pad_id=pad_id)

    # auto-sized tiles (N=18 -> TM=16: two grid steps incl. a partial block)
    loss_auto = jax.block_until_ready(
        sequence_cross_entropy_loss(predictions, targets, pad_id=pad_id))
    # forced small tiles -> three grid steps incl. a partial last block
    loss_tiled = jax.block_until_ready(
        sequence_cross_entropy_loss(predictions, targets, pad_id=pad_id,
                                    tile_rows=8))

    assert jnp.allclose(loss_auto, ref, rtol=1e-5, atol=1e-5), (loss_auto, ref)
    assert jnp.allclose(loss_tiled, ref, rtol=1e-5, atol=1e-5), (loss_tiled, ref)

    # mixed-precision path: bf16 logits stay bf16 in HBM and on the VPU;
    # only the exp/accumulation runs in f32.
    pred_bf16 = predictions.astype(jnp.bfloat16)
    ref_bf16 = _reference_loss(pred_bf16, targets, pad_id=pad_id)
    loss_bf16 = jax.block_until_ready(
        sequence_cross_entropy_loss(pred_bf16, targets, pad_id=pad_id))
    assert jnp.allclose(loss_bf16, ref_bf16, rtol=3e-2, atol=3e-2), (loss_bf16, ref_bf16)

    # TODO(synk): PyTorch raises on out-of-range target indices; here they
    # silently gather 0 for the target logit (behavioral edge case only).
    print("KERNEL_OK")
</pallas_src>

<mosaic_0001>
module attributes {stable_mosaic.version = 11 : i64} {
  func.func @_ce_kernel(%arg0: i32, %arg1: memref<16x1xi32, #tpu.memory_space<vmem>>, %arg2: memref<16x128xf32, #tpu.memory_space<vmem>>, %arg3: memref<1x8x128xf32, #tpu.memory_space<vmem>>) attributes {dimension_semantics = [#tpu.dimension_semantics<parallel>], iteration_bounds = array<i64: 2>, scalar_prefetch = 0 : i64, scratch_operands = 0 : i64, tpu.core_type = #tpu.core_type<tc>, window_params = [{transform_indices = @transform_0, window_bounds = array<i64: 16, 1>}, {transform_indices = @transform_1, window_bounds = array<i64: 16, 128>}, {transform_indices = @transform_2, window_bounds = array<i64: 1, 8, 128>}]} {
    %c0 = arith.constant 0 : index
    %c0_0 = arith.constant 0 : index
    %0 = vector.load %arg2[%c0, %c0_0] : memref<16x128xf32, #tpu.memory_space<vmem>>, vector<16x128xf32>
    %c0_1 = arith.constant 0 : index
    %c0_2 = arith.constant 0 : index
    %1 = vector.load %arg1[%c0_1, %c0_2] : memref<16x1xi32, #tpu.memory_space<vmem>>, vector<16x1xi32>
    %cst = arith.constant dense<0xFF800000> : vector<16xf32>
    %2 = vector.multi_reduction <maximumf>, %0, %cst [1] : vector<16x128xf32> to vector<16xf32>
    %3 = vector.shape_cast %2 : vector<16xf32> to vector<16x1xf32>
    %4 = tpu.iota {dimensions = array<i32: 1>} : vector<16x128xi32>
    %5 = vector.broadcast %1 : vector<16x1xi32> to vector<16x128xi32>
    %6 = arith.cmpi eq, %4, %5 : vector<16x128xi32>
    %cst_3 = arith.constant 0.000000e+00 : f32
    %7 = vector.broadcast %cst_3 : f32 to vector<16x128xf32>
    %8 = arith.select %6, %0, %7 : vector<16x128xi1>, vector<16x128xf32>
    %cst_4 = arith.constant dense<0.000000e+00> : vector<16xf32>
    %9 = vector.multi_reduction <add>, %8, %cst_4 [1] : vector<16x128xf32> to vector<16xf32>
    %10 = vector.shape_cast %9 : vector<16xf32> to vector<16x1xf32>
    %11 = vector.broadcast %3 : vector<16x1xf32> to vector<16x128xf32>
    %12 = arith.subf %0, %11 : vector<16x128xf32>
    %13 = math.exp %12 : vector<16x128xf32>
    %cst_5 = arith.constant dense<0.000000e+00> : vector<16xf32>
    %14 = vector.multi_reduction <add>, %13, %cst_5 [1] : vector<16x128xf32> to vector<16xf32>
    %15 = vector.shape_cast %14 : vector<16xf32> to vector<16x1xf32>
    %16 = math.log %15 : vector<16x1xf32>
    %17 = arith.addf %3, %16 : vector<16x1xf32>
    %18 = arith.subf %17, %10 : vector<16x1xf32>
    %c0_i32 = arith.constant 0 : i32
    %19 = vector.broadcast %c0_i32 : i32 to vector<16x1xi32>
    %20 = arith.cmpi ne, %1, %19 : vector<16x1xi32>
    %cst_6 = arith.constant 0.000000e+00 : f32
    %21 = vector.broadcast %cst_6 : f32 to vector<16x1xf32>
    %22 = arith.select %20, %18, %21 : vector<16x1xi1>, vector<16x1xf32>
    %23 = vector.shape_cast %22 : vector<16x1xf32> to vector<1x16x1xf32>
    %cst_7 = arith.constant dense<0.000000e+00> : vector<1xf32>
    %24 = vector.multi_reduction <add>, %23, %cst_7 [1, 2] : vector<1x16x1xf32> to vector<1xf32>
    %25 = vector.shape_cast %24 : vector<1xf32> to vector<1x1x1xf32>
    %26 = vector.extract %25[0, 0, 0] : f32 from vector<1x1x1xf32>
    %27 = arith.extui %20 : vector<16x1xi1> to vector<16x1xi32>
    %28 = arith.sitofp %27 : vector<16x1xi32> to vector<16x1xf32>
    %29 = vector.shape_cast %28 : vector<16x1xf32> to vector<1x16x1xf32>
    %cst_8 = arith.constant dense<0.000000e+00> : vector<1xf32>
    %30 = vector.multi_reduction <add>, %29, %cst_8 [1, 2] : vector<1x16x1xf32> to vector<1xf32>
    %31 = vector.shape_cast %30 : vector<1xf32> to vector<1x1x1xf32>
    %32 = vector.extract %31[0, 0, 0] : f32 from vector<1x1x1xf32>
    %33 = tpu.iota {dimensions = array<i32: 1>} : vector<1x8x128xi32>
    %c0_i32_9 = arith.constant 0 : i32
    %34 = vector.broadcast %c0_i32_9 : i32 to vector<1x8x128xi32>
    %35 = arith.cmpi eq, %33, %34 : vector<1x8x128xi32>
    %c1_i32 = arith.constant 1 : i32
    %36 = vector.broadcast %c1_i32 : i32 to vector<1x8x128xi32>
    %37 = arith.cmpi eq, %33, %36 : vector<1x8x128xi32>
    %cst_10 = arith.constant 0.000000e+00 : f32
    %38 = vector.broadcast %32 : f32 to vector<1x8x128xf32>
    %39 = vector.broadcast %cst_10 : f32 to vector<1x8x128xf32>
    %40 = arith.select %37, %38, %39 : vector<1x8x128xi1>, vector<1x8x128xf32>
    %41 = vector.broadcast %26 : f32 to vector<1x8x128xf32>
    %42 = arith.select %35, %41, %40 : vector<1x8x128xi1>, vector<1x8x128xf32>
    %c0_11 = arith.constant 0 : index
    %c0_12 = arith.constant 0 : index
    %c0_13 = arith.constant 0 : index
    %43 = vector.load %arg3[%c0_11, %c0_12, %c0_13] : memref<1x8x128xf32, #tpu.memory_space<vmem>>, vector<1x8x128xf32>
    tpu.vector_store %arg3[%c0_11, %c0_12, %c0_13], %42 {strides = array<i32>} : memref<1x8x128xf32, #tpu.memory_space<vmem>>, vector<1x8x128xf32>,
    return
  }
  func.func @transform_0(%arg0: i32) -> (i32, i32) {
    %c0_i32 = arith.constant 0 : i32
    %c0_i32_0 = arith.constant 0 : i32
    return %arg0, %c0_i32 : i32, i32
  }
  func.func @transform_1(%arg0: i32) -> (i32, i32) {
    %c0_i32 = arith.constant 0 : i32
    %c0_i32_0 = arith.constant 0 : i32
    return %arg0, %c0_i32 : i32, i32
  }
  func.func @transform_2(%arg0: i32) -> (i32, i32, i32) {
    %c0_i32 = arith.constant 0 : i32
    %c0_i32_0 = arith.constant 0 : i32
    %c0_i32_1 = arith.constant 0 : i32
    return %arg0, %c0_i32, %c0_i32_0 : i32, i32, i32
  }
}

</mosaic_0001>

<llo_original>
// kernel: tpu_custom_call.1
$region0: #{tpu_custom_call.1}
  #allocation0 [shape = 'u32[]', space=smem, size = 0x4, offset = 0x4, fixed_abs, tag = 'smem constant byte address 0x4 - core index']
  #allocation1 [shape = 'u32[144,128]{1,0:T(1,128)}', space=vmem, size = 0x12000, scoped, tag = 'internal scratch']
  %s0 = inlined_call_operand.vmem [shape: s32[32,1], index: 0, kind: input, shape index: {}]
  %s1 = inlined_call_operand.vmem [shape: f32[18,128], index: 1, kind: input, shape index: {}]
  %s2 = inlined_call_operand.hbm [shape: f32[2,8,128], index: 2, kind: output, shape index: {}]
  %s3 = sld [smem:[#allocation0]]
  $region41: #{tpu_custom_call.1} parent=0
    _
  %s5 = ssub.s32 1, %s3
  %s6 = scalar_select 0, %s5, %s3
  $region1: #{tpu_custom_call.1} parent=0
    #allocation2 [shape = 'u8[8192]{0}', space=vmem, size = 0x2000, scoped, tag = 'output window, operand 0']
    #allocation3 [shape = 's32[2]{0}', space=sflag, size = 0x8, scoped, tag = 'scoped memory for tpu_custom_call.1']
    %7 = vsyncpa [#allocation3], 0
    %s8 = scalar_lea.sflag [#allocation3], 1
    %9 = vsyncpa %s8, 0
    loop: start=0, step=1, limit=4
    $region2: #{tpu_custom_call.1} parent=1 // loop_pre_header
      _
    $region3: #{tpu_custom_call.1} parent=1 // loop_header
      %s11 = sphi 0, %s15
      %p12 = scmp.ge.s32.totalorder %s11, 4
      %s21 = sphi 0, %s23
      %s24 = sphi 0, %s21
      %s25 = sphi 0, %s24
      %s41 = sphi 0, %s25
      %s47 = sphi 0, %s49
      %s50 = sphi 0, %s47
      %s51 = sphi 0, %s50
      %s67 = sphi 0, %s51
      %s73 = sphi 0, %s75
      %s76 = sphi 0, %s73
      %s77 = sphi 0, %s76
      %s93 = sphi 0, %s77
    $region4: #{tpu_custom_call.1} parent=1 // loop_header_branch
      %14 = sbr.rel (%p12) target = $region8
    $region5: #{tpu_custom_call.1} parent=1 // loop_body
      %s16 = ssub.s32 %s11, 1
      %s17 = ssub.s32 %s11, 2
      %s18 = sadd.s32 %s11, 1
      %s19 = ssub.s32 %s11, %s18
      %p20 = scmp.eq.s32.totalorder %s19, 0
      %s22 = sadd.s32 %s21, 1
      %s23 = scalar_select %p20, %s21, %s22
      %p26 = pneg %p20
      %p27 = scmp.eq.s32.totalorder %s11, 1
      %p28 = por %p26, %p27
      %p29 = scmp.ne.s32.totalorder %s21, %s24
      %p30 = scmp.eq.s32.totalorder %s11, 0
      %p31 = por %p29, %p30
      %p32 = scmp.ne.s32.totalorder %s21, %s24
      %p33 = scmp.eq.s32.totalorder %s16, 1
      %p34 = por %p32, %p33
      %p35 = scmp.ne.s32.totalorder %s24, %s25
      %p36 = scmp.eq.s32.totalorder %s16, 0
      %p37 = por %p35, %p36
      %p38 = scmp.ne.s32.totalorder %s24, %s25
      %p39 = scmp.eq.s32.totalorder %s17, 1
      %p40 = por %p38, %p39
      %p42 = scmp.ne.s32.totalorder %s25, %s41
      %p43 = scmp.eq.s32.totalorder %s17, 0
      %p44 = por %p42, %p43
      %s45 = ssub.s32 %s11, %s18
      %p46 = scmp.eq.s32.totalorder %s45, 0
      %s48 = sadd.s32 %s47, 1
      %s49 = scalar_select %p46, %s47, %s48
      %p52 = pneg %p46
      %p53 = scmp.eq.s32.totalorder %s11, 1
      %p54 = por %p52, %p53
      %p55 = scmp.ne.s32.totalorder %s47, %s50
      %p56 = scmp.eq.s32.totalorder %s11, 0
      %p57 = por %p55, %p56
      %p58 = scmp.ne.s32.totalorder %s47, %s50
      %p59 = scmp.eq.s32.totalorder %s16, 1
      %p60 = por %p58, %p59
      %p61 = scmp.ne.s32.totalorder %s50, %s51
      %p62 = scmp.eq.s32.totalorder %s16, 0
      %p63 = por %p61, %p62
      %p64 = scmp.ne.s32.totalorder %s50, %s51
      %p65 = scmp.eq.s32.totalorder %s17, 1
      %p66 = por %p64, %p65
      %p68 = scmp.ne.s32.totalorder %s51, %s67
      %p69 = scmp.eq.s32.totalorder %s17, 0
      %p70 = por %p68, %p69
      %s71 = ssub.s32 %s11, %s18
      %p72 = scmp.eq.s32.totalorder %s71, 0
      %s74 = sadd.s32 %s73, 1
      %s75 = scalar_select %p72, %s73, %s74
      %p78 = pneg %p72
      %p79 = scmp.eq.s32.totalorder %s11, 1
      %p80 = por %p78, %p79
      %p81 = scmp.ne.s32.totalorder %s73, %s76
      %p82 = scmp.eq.s32.totalorder %s11, 0
      %p83 = por %p81, %p82
      %p84 = scmp.ne.s32.totalorder %s73, %s76
      %p85 = scmp.eq.s32.totalorder %s16, 1
      %p86 = por %p84, %p85
      %p87 = scmp.ne.s32.totalorder %s76, %s77
      %p88 = scmp.eq.s32.totalorder %s16, 0
      %p89 = por %p87, %p88
      %p90 = scmp.ne.s32.totalorder %s76, %s77
      %p91 = scmp.eq.s32.totalorder %s17, 1
      %p92 = por %p90, %p91
      %p94 = scmp.ne.s32.totalorder %s77, %s93
      %p95 = scmp.eq.s32.totalorder %s17, 0
      %p96 = por %p94, %p95
      %p97 = scmp.le.s32.totalorder 1, %s11
      %p98 = scmp.lt.s32.totalorder %s11, 3
      %p99 = pnand %p97, %p98
      %p100 = pneg %p99
      // Predicated region
      $region9: #{tpu_custom_call.1} parent=5 // pred_check
        _
      $region10: #{tpu_custom_call.1} parent=5 // pred_check_branch
        %102 = sbr.rel (%p99) target = $region12
      $region11: #{tpu_custom_call.1} parent=5 // pred_region
        %s103 = ssub.s32 %s11, 1
      $region12: #{tpu_custom_call.1} parent=5 // pred_fallthru
        _
      %p104 = scmp.lt.s32.totalorder %s11, 2
      // Predicated region
      $region13: #{tpu_custom_call.1} parent=5 // pred_check
        %p105 = pneg %p104
      $region14: #{tpu_custom_call.1} parent=5 // pred_check_branch
        %107 = sbr.rel (%p105) target = $region16
      $region15: #{tpu_custom_call.1} parent=5 // pred_region
        // Predicated region
        $region17: #{tpu_custom_call.1} parent=15 // pred_check
          %p108 = pneg %p31
        $region18: #{tpu_custom_call.1} parent=15 // pred_check_branch
          %110 = sbr.rel (%p108) target = $region20
        $region19: #{tpu_custom_call.1} parent=15 // pred_region
          %s111 = smul.u32 2, %s11
          %p112 = scmp.lt.s32.totalorder %s111, 3
          %s113 = scalar_select %p112, %s111, 3
          %s114 = smul.addr %s113, 8
          %s115 = scalar_lea.vmem %s0, %s114
          %s116 = smul.u32 2, %s11
        $region20: #{tpu_custom_call.1} parent=15 // pred_fallthru
          _
        // Predicated region
        $region21: #{tpu_custom_call.1} parent=15 // pred_check
          %p117 = pneg %p57
        $region22: #{tpu_custom_call.1} parent=15 // pred_check_branch
          %119 = sbr.rel (%p117) target = $region24
        $region23: #{tpu_custom_call.1} parent=15 // pred_region
          %s120 = smul.u32 2, %s11
          %s121 = ssub.s32 3, %s120
          %p122 = scmp.lt.s32.totalorder %s121, 2
          %s123 = scalar_select %p122, %s121, 2
          %s124 = smul.u32 128, %s123
          %p125 = scmp.lt.s32.totalorder %s120, 2
          %s126 = scalar_select %p125, %s120, 2
          %s127 = smul.addr %s126, 8
          %s128 = scalar_lea.vmem %s1, %s127
          %s129 = smul.u32 2, %s11
          %s130 = ssub.s32 3, %s129
          %p131 = scmp.lt.s32.totalorder %s130, 2
          %s132 = scalar_select %p131, %s130, 2
          %s133 = smul.u32 128, %s132
        $region24: #{tpu_custom_call.1} parent=15 // pred_fallthru
          _
      $region16: #{tpu_custom_call.1} parent=5 // pred_fallthru
        _
      %p134 = scmp.le.s32.totalorder 1, %s11
      %p135 = scmp.lt.s32.totalorder %s11, 3
      %p136 = pnand %p134, %p135
      %p137 = pneg %p136
      // Predicated region
      $region25: #{tpu_custom_call.1} parent=5 // pred_check
        _
      $region26: #{tpu_custom_call.1} parent=5 // pred_check_branch
        %139 = sbr.rel (%p136) target = $region28
      $region27: #{tpu_custom_call.1} parent=5 // pred_region
        %s140 = ssub.s32 %s11, 1
        %s141 = smul.u32 2, %s16
        %p142 = scmp.lt.s32.totalorder %s141, 3
        %s143 = scalar_select %p142, %s141, 3
        %s144 = smul.addr %s143, 8
        %s145 = scalar_lea.vmem %s0, %s144
        %p146 = pneg %p37
        %p147 = pneg %p34
        %s148 = smul.u32 2, %s16
        %s149 = ssub.s32 3, %s148
        %p150 = scmp.lt.s32.totalorder %s149, 2
        %s151 = scalar_select %p150, %s149, 2
        %s152 = smul.u32 128, %s151
        %p153 = scmp.lt.s32.totalorder %s148, 2
        %s154 = scalar_select %p153, %s148, 2
        %s155 = smul.addr %s154, 8
        %s156 = scalar_lea.vmem %s1, %s155
        %p157 = pneg %p63
        %p158 = pneg %p60
        %p159 = pneg %p89
        %p160 = pneg %p86
        %s161 = sand.u32 %s76, 1
        %s162 = scalar_lea.sflag [#allocation3], %s161
        %s163 = sand.u32 %s76, 1
        %s164 = smul.addr %s163, 8
        %s165 = scalar_lea.vmem [#allocation2], %s164
        %s166 = smul.u32 2, %s16
        %p167 = scmp.lt.s32.totalorder %s166, 3
        %s168 = scalar_select %p167, %s166, 3
        %s169 = smul.addr %s168, 8
        %s170 = scalar_lea.vmem %s0, %s169
        %s171 = smul.u32 2, %s16
        %s172 = smul.u32 2, %s16
        %s173 = ssub.s32 3, %s172
        %p174 = scmp.lt.s32.totalorder %s173, 2
        %s175 = scalar_select %p174, %s173, 2
        %s176 = smul.u32 128, %s175
        %p177 = scmp.lt.s32.totalorder %s172, 2
        %s178 = scalar_select %p177, %s172, 2
        %s179 = smul.addr %s178, 8
        %s180 = scalar_lea.vmem %s1, %s179
        %s181 = smul.u32 2, %s16
        %s182 = ssub.s32 3, %s181
        %p183 = scmp.lt.s32.totalorder %s182, 2
        %s184 = scalar_select %p183, %s182, 2
        %s185 = smul.u32 128, %s184
        %v186 = vld [vmem:[%s180] sm:$0xff]
        %v187 = vld [vmem:[%s180 + $0x8] sm:$0xff]
        %v188 = vld [vmem:[%s170] sm:$0xff]
        %v189 = vld [vmem:[%s170 + $0x8] sm:$0xff]
        %190 = vmax.xlane.f32.xlu0 %v186
        %v191 = vpop.xlane.xlu0 %190
        %192 = vmax.xlane.f32.xlu0 %v187
        %v193 = vpop.xlane.xlu0 %192
        %v194 = vlaneseq
        %v195 = vand.u32 %v194, 127
        %196 = vset.pattern.permute.xlu0 0
        %197 = vperm.xlu0 %196, %v188
        %v198 = vpop.permute.xlu0 %197
        %199 = vset.pattern.permute.xlu0 0
        %200 = vperm.xlu0 %199, %v189
        %v201 = vpop.permute.xlu0 %200
        %vm202 = vcmp.eq.s32.totalorder %v195, %v198
        %vm203 = vcmp.eq.s32.totalorder %v195, %v201
        %v204 = vsel %vm202, %v186, 0.0
        %v205 = vsel %vm203, %v187, 0.0
        %206 = vadd.xlane.f32.xlu0 %v204
        %v207 = vpop.xlane.xlu0 %206
        %208 = vadd.xlane.f32.xlu0 %v205
        %v209 = vpop.xlane.xlu0 %208
        %v210 = vsub.f32 %v186, %v191
        %v211 = vsub.f32 %v187, %v193
        %v212 = vmul.f32 %v210, 1.442695
        %v213 = vpow.pop %v212
        %v214 = vmul.f32 %v211, 1.442695
        %v215 = vpow.pop %v214
        %216 = vadd.xlane.f32.xlu0 %v213
        %v217 = vpop.xlane.xlu0 %216
        %218 = vadd.xlane.f32.xlu0 %v215
        %v219 = vpop.xlane.xlu0 %218
        %v220 = vlog2.pop %v217
        %v221 = vmul.f32 %v220, 0.6931472
        %v222 = vlog2.pop %v219
        %v223 = vmul.f32 %v222, 0.6931472
        %v224 = vadd.f32 %v191, %v221
        %v225 = vadd.f32 %v193, %v223
        %v226 = vsub.f32 %v224, %v207
        %v227 = vsub.f32 %v225, %v209
        %vm228 = vcmp.ne.s32.totalorder %v188, 0
        %vm229 = vcmp.ne.s32.totalorder %v189, 0
        %v230 = vsel %vm228, %v226, 0.0
        %v231 = vsel %vm229, %v227, 0.0
        %vm232 = vcmask 7168
        %v233 = vsel %vm232, %v230, 0.0
        %v234 = vsel %vm232, %v231, 0.0
        %v235 = vadd.f32 %v233, %v234
        %236 = vadd.xlane.f32.xlu0 %v235
        %v237 = vpop.xlane.xlu0 %236
        %v238 = vrot.slane %v237, 4
        %v239 = vadd.f32 %v237, %v238
        %v240 = vrot.slane %v239, 2
        %v241 = vadd.f32 %v239, %v240
        %v242 = vrot.slane %v241, 1
        %v243 = vadd.f32 %v241, %v242
        %s244 = vtos %v243
        %v245 = vsel %vm228, 1, 0
        %v246 = vsel %vm229, 1, 0
        %v247 = vcvt.s32.f32 %v245
        %v248 = vcvt.s32.f32 %v246
        %v249 = vsel %vm232, %v247, 0.0
        %v250 = vsel %vm232, %v248, 0.0
        %v251 = vadd.f32 %v249, %v250
        %252 = vadd.xlane.f32.xlu0 %v251
        %v253 = vpop.xlane.xlu0 %252
        %v254 = vrot.slane %v253, 4
        %v255 = vadd.f32 %v253, %v254
        %v256 = vrot.slane %v255, 2
        %v257 = vadd.f32 %v255, %v256
        %v258 = vrot.slane %v257, 1
        %v259 = vadd.f32 %v257, %v258
        %s260 = vtos %v259
        %v261 = vlaneseq
        %v262 = vshrl.u32 %v261, 7
        %vm263 = vcmp.eq.s32.totalorder %v262, 0
        %vm264 = vcmp.eq.s32.totalorder %v262, 1
        %v265 = vstv %s260
        %v266 = vsel %vm264, %v265, 0.0
        %v267 = vstv %s244
        %v268 = vsel %vm263, %v267, %v266
        %269 = vst [vmem:[%s165] sm:$0xff] %v268
        %s270 = sand.u32 %s76, 1
        %s271 = scalar_lea.sflag [#allocation3], %s270
        %s272 = sand.u32 %s76, 1
        %s273 = smul.addr %s272, 8
        %s274 = scalar_lea.vmem [#allocation2], %s273
        // Predicated region
        $region29: #{tpu_custom_call.1} parent=27 // pred_check
          %p275 = pneg %p86
        $region30: #{tpu_custom_call.1} parent=27 // pred_check_branch
          %277 = sbr.rel (%p275) target = $region32
        $region31: #{tpu_custom_call.1} parent=27 // pred_region
          %s279 = ssub.s32 128, 128
          %280 = vsyncadd %s271, %s279
          %s281 = smul.addr %s16, 128
          %s282 = scalar_lea.hbm %s2, %s281
          %s284 = sshll.u32 %s274, 4
          %s285 = int_to_ptr.vmem [resolvable:$true] %s284
          %287 = dma.vmem_to_hbm [thread:$0]  %s285, 128, %s282, %s271
        $region32: #{tpu_custom_call.1} parent=27 // pred_fallthru
          _
      $region28: #{tpu_custom_call.1} parent=5 // pred_fallthru
        _
      %p288 = scmp.le.s32.totalorder 2, %s11
      // Predicated region
      $region33: #{tpu_custom_call.1} parent=5 // pred_check
        %p289 = pneg %p288
      $region34: #{tpu_custom_call.1} parent=5 // pred_check_branch
        %291 = sbr.rel (%p289) target = $region36
      $region35: #{tpu_custom_call.1} parent=5 // pred_region
        %s292 = ssub.s32 %s11, 2
        // Predicated region
        $region37: #{tpu_custom_call.1} parent=35 // pred_check
          %p293 = pneg %p92
        $region38: #{tpu_custom_call.1} parent=35 // pred_check_branch
          %295 = sbr.rel (%p293) target = $region40
        $region39: #{tpu_custom_call.1} parent=35 // pred_region
          %s296 = sand.u32 %s77, 1
          %s297 = scalar_lea.sflag [#allocation3], %s296
          %s298 = sand.u32 %s77, 1
          %s299 = smul.addr %s298, 8
          %s300 = scalar_lea.vmem [#allocation2], %s299
          %301 = dma.done %s297, 128
        $region40: #{tpu_custom_call.1} parent=35 // pred_fallthru
          _
      $region36: #{tpu_custom_call.1} parent=5 // pred_fallthru
        _
    $region6: #{tpu_custom_call.1} parent=1 // loop_footer
      %s15 = sadd.s32 1, %s11
    $region7: #{tpu_custom_call.1} parent=1 // loop_footer_branch
      %10 = sbr.rel target = $region3
    $region8: #{tpu_custom_call.1} parent=1 // loop_exit
      _
    %302 = vsyncpa [#allocation3], 1
    %s303 = scalar_lea.sflag [#allocation3], 1
    %304 = vsyncpa %s303, 1

</llo_original>
